<compile_context>
chip_gen: v6e
topology: v6e:2x2x1
jax: 0.10.0
libtpu: 0.0.40
codegen_flags: <defaults>
</compile_context>

<pallas_src>
import functools

import jax
import jax.numpy as jnp
from jax import lax
from jax.experimental import pallas as pl
from jax.experimental.pallas import tpu as pltpu

_EPS = 1e-5
_ROW_CHUNK = 256      # rows per in-kernel reduction chunk (multiple of 8)
_SMALL_N = 512        # below this, whole-block math (temps are tiny)


# ---------------------------------------------------------------------------
# Kernels
# ---------------------------------------------------------------------------
def _bn1d_single_pass_kernel(x_ref, gamma_ref, beta_ref, o_ref):
    """One (N, TC) block: stats + fused normalize; one HBM read, one write."""
    n, tc = x_ref.shape
    inv_n = jnp.float32(1.0 / n)

    if n <= _SMALL_N:
        # Small block: temporaries are tiny, skip chunking.
        x = x_ref[...].astype(jnp.float32)
        mean = jnp.sum(x, axis=0, keepdims=True) * inv_n
        d = x - mean
        var = jnp.sum(d * d, axis=0, keepdims=True) * inv_n   # two-pass var
        inv_std = lax.rsqrt(var + _EPS)                        # EUP slot
        scale = gamma_ref[...] * inv_std
        shift = beta_ref[...] - mean * scale
        o_ref[...] = (x * scale + shift).astype(o_ref.dtype)
        return

    rc = _ROW_CHUNK
    n_full = n // rc
    rem = n - n_full * rc
    unroll = n_full <= 8

    def chunk(i):
        r = pl.multiple_of(i * rc, rc)
        return x_ref[pl.ds(r, rc), :].astype(jnp.float32)

    # Pass 1: per-channel mean (f32 accumulation, chunked — no (N,TC) f32 copy).
    def sum_body(i, acc):
        return acc + jnp.sum(chunk(i), axis=0, keepdims=True)

    s = lax.fori_loop(0, n_full, sum_body,
                      jnp.zeros((1, tc), jnp.float32), unroll=unroll)
    if rem:
        tail = x_ref[pl.ds(n_full * rc, rem), :].astype(jnp.float32)
        s = s + jnp.sum(tail, axis=0, keepdims=True)
    mean = s * inv_n

    # Pass 2: sum of squared deviations (two-pass variance, cancellation-safe).
    def var_body(i, acc):
        d = chunk(i) - mean
        return acc + jnp.sum(d * d, axis=0, keepdims=True)

    ss = lax.fori_loop(0, n_full, var_body,
                       jnp.zeros((1, tc), jnp.float32), unroll=unroll)
    if rem:
        d = x_ref[pl.ds(n_full * rc, rem), :].astype(jnp.float32) - mean
        ss = ss + jnp.sum(d * d, axis=0, keepdims=True)
    var = ss * inv_n

    inv_std = lax.rsqrt(var + _EPS)                            # EUP slot
    scale = gamma_ref[...] * inv_std
    shift = beta_ref[...] - mean * scale

    # Pass 3: fused normalize, re-reading x_ref chunk by chunk (one FMA each).
    def norm_body(i, carry):
        r = pl.multiple_of(i * rc, rc)
        xc = x_ref[pl.ds(r, rc), :].astype(jnp.float32)
        o_ref[pl.ds(r, rc), :] = (xc * scale + shift).astype(o_ref.dtype)
        return carry

    lax.fori_loop(0, n_full, norm_body, 0, unroll=unroll)
    if rem:
        tail = x_ref[pl.ds(n_full * rc, rem), :].astype(jnp.float32)
        o_ref[pl.ds(n_full * rc, rem), :] = (
            tail * scale + shift).astype(o_ref.dtype)


def _bn1d_stats_kernel(x_ref, gamma_ref, beta_ref, scale_ref, shift_ref,
                       sum_sc, sq_sc, *, n_total):
    """Tall-N fallback, phase 1: accumulate per-channel stats over row blocks.

    grid = (channel_tiles, row_tiles); the trailing row axis is the reduction
    ("arbitrary"); scale/shift outputs are written once at the last row block.
    """
    i_n = pl.program_id(1)
    rn = x_ref.shape[0]

    @pl.when(i_n == 0)
    def _init():
        sum_sc[...] = jnp.zeros_like(sum_sc)
        sq_sc[...] = jnp.zeros_like(sq_sc)

    x = x_ref[...].astype(jnp.float32)
    if n_total % rn != 0:
        # Mask the padded rows of the ragged last block.
        row = lax.broadcasted_iota(jnp.int32, x.shape, 0)
        x = jnp.where(i_n * rn + row < n_total, x, 0.0)
    sum_sc[...] += jnp.sum(x, axis=0, keepdims=True)
    sq_sc[...] += jnp.sum(x * x, axis=0, keepdims=True)

    @pl.when(i_n == pl.num_programs(1) - 1)
    def _finalize():
        inv_n = jnp.float32(1.0 / n_total)
        mean = sum_sc[...] * inv_n
        # TODO(synk): streaming path uses E[x^2]-mean^2 (single read of x);
        # the clamp guards f32 cancellation — a shifted accumulation would be
        # more robust when |mean| >> std.
        var = jnp.maximum(sq_sc[...] * inv_n - mean * mean, 0.0)
        inv_std = lax.rsqrt(var + _EPS)
        scale = gamma_ref[...] * inv_std
        scale_ref[...] = scale
        shift_ref[...] = beta_ref[...] - mean * scale


def _bn1d_apply_kernel(x_ref, scale_ref, shift_ref, o_ref):
    """Tall-N fallback, phase 2: y = x * scale + shift on (RN, TC) blocks."""
    x = x_ref[...].astype(jnp.float32)
    o_ref[...] = (x * scale_ref[...] + shift_ref[...]).astype(o_ref.dtype)


# ---------------------------------------------------------------------------
# Planning / wrapper
# ---------------------------------------------------------------------------
def _vmem_limit_bytes():
    """Generation-aware scoped-VMEM limit (~75% of physical capacity)."""
    cap = 64 * 1024 * 1024        # conservative default = v7x physical VMEM
    try:
        cap = int(getattr(pltpu.get_tpu_info(), "vmem_capacity_bytes", cap))
    except Exception:
        pass
    return (cap * 3) // 4


def _plan_tiles(n, c, in_itemsize, out_itemsize, vmem_limit):
    """Pick (mode, channel_tile, row_tile).

    "single":    grid over channel tiles, full batch per block
                 (one HBM read + one write per element).
    "two_phase": tall-N fallback, row-tiled stats sweep + normalize sweep.
    Budget ~half the scoped VMEM limit for the double-buffered in+out blocks,
    leaving the rest for chunk temporaries and compiler headroom.
    """
    budget = vmem_limit // 2

    if c % 128 == 0:
        cands = [t for t in range(128, c + 1, 128) if c % t == 0]
    else:
        # Non-lane-aligned channel count: single full-width block.  The masked
        # lane tail is cheaper than an extra HBM pad copy of x for such shapes.
        cands = [c]

    def single_block_bytes(tc):
        return 2 * n * tc * (in_itemsize + out_itemsize)   # double-buffered

    fitting = [t for t in cands if single_block_bytes(t) <= budget]
    if fitting:
        # Prefer an even number of channel tiles so the "parallel" grid axis
        # splits evenly across v7x's two TensorCores (no-op on v5e/v6e).
        even = [t for t in fitting if (c // t) % 2 == 0]
        tc = max(even) if even else max(fitting)
        return "single", tc, None

    # Tall-N fallback: smallest lane-aligned channel tile; rows sized so
    # double-buffered in+out plus one f32 temp fit the budget.
    tc = min(cands)
    per_row = tc * (2 * (in_itemsize + out_itemsize) + 4)
    rn = max(8, min(n, budget // per_row) // 8 * 8)
    return "two_phase", tc, rn


def batch_norm_1d(x, gamma, beta, *, tile_channels=None, tile_rows=None):
    """x: (N, C) float array; gamma/beta: (C,). Training-mode BN forward.

    tile_channels / tile_rows override the automatic tiling; passing tile_rows
    forces the two-phase tall-N path.
    """
    n, c = x.shape
    gamma2d = gamma.reshape(1, c).astype(jnp.float32)
    beta2d = beta.reshape(1, c).astype(jnp.float32)

    vmem_limit = _vmem_limit_bytes()
    mode, tc, rn = _plan_tiles(n, c, x.dtype.itemsize, x.dtype.itemsize,
                               vmem_limit)
    if tile_channels is not None:
        tc = tile_channels if c % tile_channels == 0 else c
    if tile_rows is not None:
        mode, rn = "two_phase", int(tile_rows)

    def cparams(dims):
        return pltpu.CompilerParams(dimension_semantics=dims,
                                    vmem_limit_bytes=vmem_limit)

    if mode == "single":
        # TODO(synk): if xprof shows exposed input DMA at block boundaries,
        # bump the x BlockSpec to pipeline_mode=pl.Buffered(3).
        return pl.pallas_call(
            _bn1d_single_pass_kernel,
            out_shape=jax.ShapeDtypeStruct((n, c), x.dtype),
            grid=(c // tc,),
            in_specs=[
                pl.BlockSpec((n, tc), lambda j: (0, j)),
                pl.BlockSpec((1, tc), lambda j: (0, j)),
                pl.BlockSpec((1, tc), lambda j: (0, j)),
            ],
            out_specs=pl.BlockSpec((n, tc), lambda j: (0, j)),
            compiler_params=cparams(("parallel",)),
        )(x, gamma2d, beta2d)

    # --- Two-phase tall-N path ---------------------------------------------
    c_tiles = c // tc
    n_tiles = pl.cdiv(n, rn)

    scale, shift = pl.pallas_call(
        functools.partial(_bn1d_stats_kernel, n_total=n),
        out_shape=(jax.ShapeDtypeStruct((1, c), jnp.float32),
                   jax.ShapeDtypeStruct((1, c), jnp.float32)),
        grid=(c_tiles, n_tiles),
        in_specs=[
            pl.BlockSpec((rn, tc), lambda j, i: (i, j)),
            pl.BlockSpec((1, tc), lambda j, i: (0, j)),
            pl.BlockSpec((1, tc), lambda j, i: (0, j)),
        ],
        out_specs=(
            pl.BlockSpec((1, tc), lambda j, i: (0, j)),
            pl.BlockSpec((1, tc), lambda j, i: (0, j)),
        ),
        scratch_shapes=[pltpu.VMEM((1, tc), jnp.float32),
                        pltpu.VMEM((1, tc), jnp.float32)],
        compiler_params=cparams(("parallel", "arbitrary")),
    )(x, gamma2d, beta2d)

    return pl.pallas_call(
        _bn1d_apply_kernel,
        out_shape=jax.ShapeDtypeStruct((n, c), x.dtype),
        grid=(c_tiles, n_tiles),
        in_specs=[
            pl.BlockSpec((rn, tc), lambda j, i: (i, j)),
            pl.BlockSpec((1, tc), lambda j, i: (0, j)),
            pl.BlockSpec((1, tc), lambda j, i: (0, j)),
        ],
        out_specs=pl.BlockSpec((rn, tc), lambda j, i: (i, j)),
        compiler_params=cparams(("parallel", "parallel")),
    )(x, scale, shift)


class BatchNorm1d:
    """JAX/Pallas equivalent of the PyTorch BatchNorm1d wrapper (training fwd)."""

    def __init__(self, dim, affine=True, momentum=0.1):
        self.dim = dim
        self.affine = affine
        # TODO(synk): running-stat (momentum) updates / eval mode not implemented.
        self.momentum = momentum
        self.weight = jnp.ones((dim,), jnp.float32)
        self.bias = jnp.zeros((dim,), jnp.float32)

    def __call__(self, x):
        x2d = x.reshape(-1, self.dim)  # mirrors x.view(-1, dim, 1, 1) -> (-1, dim)
        if self.affine:
            g, b = self.weight, self.bias
        else:
            g = jnp.ones((self.dim,), jnp.float32)
            b = jnp.zeros((self.dim,), jnp.float32)
        return batch_norm_1d(x2d, g, b)


def _reference_bn(x):
    mean = jnp.mean(x, axis=0, keepdims=True)
    var = jnp.mean((x - mean) ** 2, axis=0, keepdims=True)
    return (x - mean) / jnp.sqrt(var + _EPS)


if __name__ == "__main__":
    key = jax.random.PRNGKey(0)
    k1, k2, k3, k4 = jax.random.split(key, 4)

    # Case 1: lane-aligned channels, explicit tiling -> single-pass, grid=(3,).
    x1 = jax.random.normal(k1, (16, 384), jnp.float32) * 2.0 + 0.5
    bn1 = BatchNorm1d(384)
    out1 = jax.block_until_ready(
        batch_norm_1d(x1, bn1.weight, bn1.bias, tile_channels=128))
    assert out1.shape == (16, 384)
    assert jnp.max(jnp.abs(out1 - _reference_bn(x1))) < 1e-4

    # Case 2: non-128-multiple channel count -> full-width block fallback.
    x2 = jax.random.normal(k2, (8, 32), jnp.float32) * 2.0 + 0.5
    out2 = jax.block_until_ready(BatchNorm1d(32)(x2))
    assert out2.shape == (8, 32)
    assert jnp.max(jnp.abs(out2 - _reference_bn(x2))) < 1e-4

    # Case 3: forced two-phase tall-N path with a ragged last row block.
    x3 = jax.random.normal(k3, (20, 256), jnp.float32) * 2.0 + 0.5
    bn3 = BatchNorm1d(256)
    out3 = jax.block_until_ready(
        batch_norm_1d(x3, bn3.weight, bn3.bias, tile_rows=8))
    assert out3.shape == (20, 256)
    assert jnp.max(jnp.abs(out3 - _reference_bn(x3))) < 1e-4

    # Case 4: batch tall enough to exercise the chunked single-pass reduction
    # (4 full 256-row chunks + a 16-row tail), automatic tiling.
    x4 = jax.random.normal(k4, (1040, 256), jnp.float32) * 2.0 + 0.5
    out4 = jax.block_until_ready(BatchNorm1d(256)(x4))
    assert out4.shape == (1040, 256)
    assert jnp.max(jnp.abs(out4 - _reference_bn(x4))) < 5e-4

    print("KERNEL_OK")
</pallas_src>

<mosaic_0001>
module attributes {stable_mosaic.version = 11 : i64} {
  func.func @_bn1d_single_pass_kernel(%arg0: i32, %arg1: memref<16x128xf32, #tpu.memory_space<vmem>>, %arg2: memref<1x128xf32, #tpu.memory_space<vmem>>, %arg3: memref<1x128xf32, #tpu.memory_space<vmem>>, %arg4: memref<16x128xf32, #tpu.memory_space<vmem>>) attributes {dimension_semantics = [#tpu.dimension_semantics<parallel>], iteration_bounds = array<i64: 3>, scalar_prefetch = 0 : i64, scratch_operands = 0 : i64, tpu.core_type = #tpu.core_type<tc>, window_params = [{transform_indices = @transform_0, window_bounds = array<i64: 16, 128>}, {transform_indices = @transform_1, window_bounds = array<i64: 1, 128>}, {transform_indices = @transform_2, window_bounds = array<i64: 1, 128>}, {transform_indices = @transform_3, window_bounds = array<i64: 16, 128>}]} {
    %c0 = arith.constant 0 : index
    %c0_0 = arith.constant 0 : index
    %0 = vector.load %arg1[%c0, %c0_0] : memref<16x128xf32, #tpu.memory_space<vmem>>, vector<16x128xf32>
    %cst = arith.constant dense<0.000000e+00> : vector<128xf32>
    %1 = vector.multi_reduction <add>, %0, %cst [0] : vector<16x128xf32> to vector<128xf32>
    %2 = vector.shape_cast %1 : vector<128xf32> to vector<1x128xf32>
    %cst_1 = arith.constant 6.250000e-02 : f32
    %3 = vector.broadcast %cst_1 : f32 to vector<1x128xf32>
    %4 = arith.mulf %2, %3 : vector<1x128xf32>
    %5 = vector.broadcast %4 : vector<1x128xf32> to vector<16x128xf32>
    %6 = arith.subf %0, %5 : vector<16x128xf32>
    %7 = arith.mulf %6, %6 : vector<16x128xf32>
    %cst_2 = arith.constant dense<0.000000e+00> : vector<128xf32>
    %8 = vector.multi_reduction <add>, %7, %cst_2 [0] : vector<16x128xf32> to vector<128xf32>
    %9 = vector.shape_cast %8 : vector<128xf32> to vector<1x128xf32>
    %cst_3 = arith.constant 6.250000e-02 : f32
    %10 = vector.broadcast %cst_3 : f32 to vector<1x128xf32>
    %11 = arith.mulf %9, %10 : vector<1x128xf32>
    %cst_4 = arith.constant 9.99999974E-6 : f32
    %12 = vector.broadcast %cst_4 : f32 to vector<1x128xf32>
    %13 = arith.addf %11, %12 : vector<1x128xf32>
    %14 = math.rsqrt %13 : vector<1x128xf32>
    %c0_5 = arith.constant 0 : index
    %c0_6 = arith.constant 0 : index
    %15 = vector.load %arg2[%c0_5, %c0_6] : memref<1x128xf32, #tpu.memory_space<vmem>>, vector<1x128xf32>
    %16 = arith.mulf %15, %14 : vector<1x128xf32>
    %c0_7 = arith.constant 0 : index
    %c0_8 = arith.constant 0 : index
    %17 = vector.load %arg3[%c0_7, %c0_8] : memref<1x128xf32, #tpu.memory_space<vmem>>, vector<1x128xf32>
    %18 = arith.mulf %4, %16 : vector<1x128xf32>
    %19 = arith.subf %17, %18 : vector<1x128xf32>
    %20 = vector.broadcast %16 : vector<1x128xf32> to vector<16x128xf32>
    %21 = arith.mulf %0, %20 : vector<16x128xf32>
    %22 = vector.broadcast %19 : vector<1x128xf32> to vector<16x128xf32>
    %23 = arith.addf %21, %22 : vector<16x128xf32>
    %c0_9 = arith.constant 0 : index
    %c0_10 = arith.constant 0 : index
    %24 = vector.load %arg4[%c0_9, %c0_10] : memref<16x128xf32, #tpu.memory_space<vmem>>, vector<16x128xf32>
    tpu.vector_store %arg4[%c0_9, %c0_10], %23 {strides = array<i32>} : memref<16x128xf32, #tpu.memory_space<vmem>>, vector<16x128xf32>,
    return
  }
  func.func @transform_0(%arg0: i32) -> (i32, i32) {
    %c0_i32 = arith.constant 0 : i32
    %c0_i32_0 = arith.constant 0 : i32
    return %c0_i32, %arg0 : i32, i32
  }
  func.func @transform_1(%arg0: i32) -> (i32, i32) {
    %c0_i32 = arith.constant 0 : i32
    %c0_i32_0 = arith.constant 0 : i32
    return %c0_i32, %arg0 : i32, i32
  }
  func.func @transform_2(%arg0: i32) -> (i32, i32) {
    %c0_i32 = arith.constant 0 : i32
    %c0_i32_0 = arith.constant 0 : i32
    return %c0_i32, %arg0 : i32, i32
  }
  func.func @transform_3(%arg0: i32) -> (i32, i32) {
    %c0_i32 = arith.constant 0 : i32
    %c0_i32_0 = arith.constant 0 : i32
    return %c0_i32, %arg0 : i32, i32
  }
}

</mosaic_0001>

<llo_original>
// kernel: tpu_custom_call.1
$region0: #{tpu_custom_call.1}
  #allocation0 [shape = 'u32[]', space=smem, size = 0x4, offset = 0x4, fixed_abs, tag = 'smem constant byte address 0x4 - core index']
  #allocation1 [shape = 'u32[144,128]{1,0:T(1,128)}', space=vmem, size = 0x12000, scoped, tag = 'internal scratch']
  %s0 = inlined_call_operand.hbm [shape: f32[16,384], index: 0, kind: input, shape index: {}]
  %s1 = inlined_call_operand.hbm [shape: f32[1,384], index: 1, kind: input, shape index: {}]
  %s2 = inlined_call_operand.vmem [shape: f32[1,384], index: 2, kind: input, shape index: {}]
  %s3 = inlined_call_operand.hbm [shape: f32[16,384], index: 3, kind: output, shape index: {}]
  %s4 = sld [smem:[#allocation0]]
  $region53: #{tpu_custom_call.1} parent=0
    _
  %s6 = ssub.s32 1, %s4
  %s7 = scalar_select 0, %s6, %s4
  $region1: #{tpu_custom_call.1} parent=0
    #allocation2 [shape = 'u8[16384]{0}', space=vmem, size = 0x4000, scoped, tag = 'input window, operand 0']
    #allocation3 [shape = 's32[2]{0}', space=sflag, size = 0x8, scoped, tag = 'scoped memory for tpu_custom_call.1']
    #allocation4 [shape = 's32[2]{0}', space=sflag, size = 0x8, scoped, tag = 'scoped memory for tpu_custom_call.1']
    #allocation5 [shape = 'u8[1024]{0}', space=vmem, size = 0x400, scoped, tag = 'input window, operand 1']
    #allocation6 [shape = 's32[2]{0}', space=sflag, size = 0x8, scoped, tag = 'scoped memory for tpu_custom_call.1']
    #allocation7 [shape = 'u8[16384]{0}', space=vmem, size = 0x4000, scoped, tag = 'output window, operand 0']
    %8 = vsyncpa [#allocation3], 0
    %s9 = scalar_lea.sflag [#allocation3], 1
    %10 = vsyncpa %s9, 0
    %11 = vsyncpa [#allocation6], 0
    %s12 = scalar_lea.sflag [#allocation6], 1
    %13 = vsyncpa %s12, 0
    %14 = vsyncpa [#allocation4], 0
    %s15 = scalar_lea.sflag [#allocation4], 1
    %16 = vsyncpa %s15, 0
    loop: start=0, step=1, limit=5
    $region2: #{tpu_custom_call.1} parent=1 // loop_pre_header
      _
    $region3: #{tpu_custom_call.1} parent=1 // loop_header
      %s18 = sphi 0, %s22
      %p19 = scmp.ge.s32.totalorder %s18, 5
      %s28 = sphi 0, %s30
      %s31 = sphi 0, %s28
      %s32 = sphi 0, %s31
      %s48 = sphi 0, %s32
      %s54 = sphi 0, %s56
      %s57 = sphi 0, %s54
      %s58 = sphi 0, %s57
      %s74 = sphi 0, %s58
      %s80 = sphi 0, %s82
      %s83 = sphi 0, %s80
      %s84 = sphi 0, %s83
      %s100 = sphi 0, %s84
      %s106 = sphi 0, %s108
      %s109 = sphi 0, %s106
      %s110 = sphi 0, %s109
      %s126 = sphi 0, %s110
    $region4: #{tpu_custom_call.1} parent=1 // loop_header_branch
      %21 = sbr.rel (%p19) target = $region8
    $region5: #{tpu_custom_call.1} parent=1 // loop_body
      %s23 = ssub.s32 %s18, 1
      %s24 = ssub.s32 %s18, 2
      %s25 = sadd.s32 %s18, 1
      %s26 = ssub.s32 %s18, %s25
      %p27 = scmp.eq.s32.totalorder %s26, 0
      %s29 = sadd.s32 %s28, 1
      %s30 = scalar_select %p27, %s28, %s29
      %p33 = pneg %p27
      %p34 = scmp.eq.s32.totalorder %s18, 2
      %p35 = por %p33, %p34
      %p36 = scmp.ne.s32.totalorder %s28, %s31
      %p37 = scmp.eq.s32.totalorder %s18, 0
      %p38 = por %p36, %p37
      %p39 = scmp.ne.s32.totalorder %s28, %s31
      %p40 = scmp.eq.s32.totalorder %s23, 2
      %p41 = por %p39, %p40
      %p42 = scmp.ne.s32.totalorder %s31, %s32
      %p43 = scmp.eq.s32.totalorder %s23, 0
      %p44 = por %p42, %p43
      %p45 = scmp.ne.s32.totalorder %s31, %s32
      %p46 = scmp.eq.s32.totalorder %s24, 2
      %p47 = por %p45, %p46
      %p49 = scmp.ne.s32.totalorder %s32, %s48
      %p50 = scmp.eq.s32.totalorder %s24, 0
      %p51 = por %p49, %p50
      %s52 = ssub.s32 %s18, %s25
      %p53 = scmp.eq.s32.totalorder %s52, 0
      %s55 = sadd.s32 %s54, 1
      %s56 = scalar_select %p53, %s54, %s55
      %p59 = pneg %p53
      %p60 = scmp.eq.s32.totalorder %s18, 2
      %p61 = por %p59, %p60
      %p62 = scmp.ne.s32.totalorder %s54, %s57
      %p63 = scmp.eq.s32.totalorder %s18, 0
      %p64 = por %p62, %p63
      %p65 = scmp.ne.s32.totalorder %s54, %s57
      %p66 = scmp.eq.s32.totalorder %s23, 2
      %p67 = por %p65, %p66
      %p68 = scmp.ne.s32.totalorder %s57, %s58
      %p69 = scmp.eq.s32.totalorder %s23, 0
      %p70 = por %p68, %p69
      %p71 = scmp.ne.s32.totalorder %s57, %s58
      %p72 = scmp.eq.s32.totalorder %s24, 2
      %p73 = por %p71, %p72
      %p75 = scmp.ne.s32.totalorder %s58, %s74
      %p76 = scmp.eq.s32.totalorder %s24, 0
      %p77 = por %p75, %p76
      %s78 = ssub.s32 %s18, %s25
      %p79 = scmp.eq.s32.totalorder %s78, 0
      %s81 = sadd.s32 %s80, 1
      %s82 = scalar_select %p79, %s80, %s81
      %p85 = pneg %p79
      %p86 = scmp.eq.s32.totalorder %s18, 2
      %p87 = por %p85, %p86
      %p88 = scmp.ne.s32.totalorder %s80, %s83
      %p89 = scmp.eq.s32.totalorder %s18, 0
      %p90 = por %p88, %p89
      %p91 = scmp.ne.s32.totalorder %s80, %s83
      %p92 = scmp.eq.s32.totalorder %s23, 2
      %p93 = por %p91, %p92
      %p94 = scmp.ne.s32.totalorder %s83, %s84
      %p95 = scmp.eq.s32.totalorder %s23, 0
      %p96 = por %p94, %p95
      %p97 = scmp.ne.s32.totalorder %s83, %s84
      %p98 = scmp.eq.s32.totalorder %s24, 2
      %p99 = por %p97, %p98
      %p101 = scmp.ne.s32.totalorder %s84, %s100
      %p102 = scmp.eq.s32.totalorder %s24, 0
      %p103 = por %p101, %p102
      %s104 = ssub.s32 %s18, %s25
      %p105 = scmp.eq.s32.totalorder %s104, 0
      %s107 = sadd.s32 %s106, 1
      %s108 = scalar_select %p105, %s106, %s107
      %p111 = pneg %p105
      %p112 = scmp.eq.s32.totalorder %s18, 2
      %p113 = por %p111, %p112
      %p114 = scmp.ne.s32.totalorder %s106, %s109
      %p115 = scmp.eq.s32.totalorder %s18, 0
      %p116 = por %p114, %p115
      %p117 = scmp.ne.s32.totalorder %s106, %s109
      %p118 = scmp.eq.s32.totalorder %s23, 2
      %p119 = por %p117, %p118
      %p120 = scmp.ne.s32.totalorder %s109, %s110
      %p121 = scmp.eq.s32.totalorder %s23, 0
      %p122 = por %p120, %p121
      %p123 = scmp.ne.s32.totalorder %s109, %s110
      %p124 = scmp.eq.s32.totalorder %s24, 2
      %p125 = por %p123, %p124
      %p127 = scmp.ne.s32.totalorder %s110, %s126
      %p128 = scmp.eq.s32.totalorder %s24, 0
      %p129 = por %p127, %p128
      %p130 = scmp.le.s32.totalorder 1, %s18
      %p131 = scmp.lt.s32.totalorder %s18, 4
      %p132 = pnand %p130, %p131
      %p133 = pneg %p132
      // Predicated region
      $region9: #{tpu_custom_call.1} parent=5 // pred_check
        _
      $region10: #{tpu_custom_call.1} parent=5 // pred_check_branch
        %135 = sbr.rel (%p132) target = $region12
      $region11: #{tpu_custom_call.1} parent=5 // pred_region
        %s136 = ssub.s32 %s18, 1
      $region12: #{tpu_custom_call.1} parent=5 // pred_fallthru
        _
      %p137 = scmp.lt.s32.totalorder %s18, 3
      // Predicated region
      $region13: #{tpu_custom_call.1} parent=5 // pred_check
        %p138 = pneg %p137
      $region14: #{tpu_custom_call.1} parent=5 // pred_check_branch
        %140 = sbr.rel (%p138) target = $region16
      $region15: #{tpu_custom_call.1} parent=5 // pred_region
        // Predicated region
        $region17: #{tpu_custom_call.1} parent=15 // pred_check
          %p141 = pneg %p38
        $region18: #{tpu_custom_call.1} parent=15 // pred_check_branch
          %143 = sbr.rel (%p141) target = $region20
        $region19: #{tpu_custom_call.1} parent=15 // pred_region
          %s144 = sand.u32 %s28, 1
          %s145 = scalar_lea.sflag [#allocation3], %s144
          %s146 = sand.u32 %s28, 1
          %s147 = smul.addr %s146, 16
          %s148 = scalar_lea.vmem [#allocation2], %s147
          %s150 = ssub.s32 256, 256
          %151 = vsyncadd %s145, %s150
          %s152 = smul.addr %s18, 128
          %s153 = scalar_lea.hbm %s0, %s152
          %s154 = sshll.u32 %s148, 4
          %s155 = int_to_ptr.vmem [resolvable:$true] %s154
          %160 = dma.hbm_to_vmem [thread:$0]  %s153, 256, %s155, %s145, 384, 128, 8
        $region20: #{tpu_custom_call.1} parent=15 // pred_fallthru
          _
        // Predicated region
        $region21: #{tpu_custom_call.1} parent=15 // pred_check
          %p161 = pneg %p64
        $region22: #{tpu_custom_call.1} parent=15 // pred_check_branch
          %163 = sbr.rel (%p161) target = $region24
        $region23: #{tpu_custom_call.1} parent=15 // pred_region
          %s164 = sand.u32 %s54, 1
          %s165 = scalar_lea.sflag [#allocation6], %s164
          %s166 = sand.u32 %s54, 1
          %s167 = scalar_lea.vmem [#allocation5], %s166
          %s169 = ssub.s32 16, 16
          %170 = vsyncadd %s165, %s169
          %s171 = smul.addr %s18, 16
          %s172 = scalar_lea.hbm %s1, %s171
          %s174 = sshll.u32 %s167, 4
          %s175 = int_to_ptr.vmem [resolvable:$true] %s174
          %177 = dma.hbm_to_vmem [thread:$0]  %s172, 16, %s175, %s165
        $region24: #{tpu_custom_call.1} parent=15 // pred_fallthru
          _
        // Predicated region
        $region25: #{tpu_custom_call.1} parent=15 // pred_check
          %p178 = pneg %p90
        $region26: #{tpu_custom_call.1} parent=15 // pred_check_branch
          %180 = sbr.rel (%p178) target = $region28
        $region27: #{tpu_custom_call.1} parent=15 // pred_region
          %p181 = scmp.lt.s32.totalorder %s18, 2
          %s182 = scalar_select %p181, %s18, 2
          %s183 = scalar_lea.vmem %s2, %s182
        $region28: #{tpu_custom_call.1} parent=15 // pred_fallthru
          _
      $region16: #{tpu_custom_call.1} parent=5 // pred_fallthru
        _
      %p184 = scmp.le.s32.totalorder 1, %s18
      %p185 = scmp.lt.s32.totalorder %s18, 4
      %p186 = pnand %p184, %p185
      %p187 = pneg %p186
      // Predicated region
      $region29: #{tpu_custom_call.1} parent=5 // pred_check
        _
      $region30: #{tpu_custom_call.1} parent=5 // pred_check_branch
        %189 = sbr.rel (%p186) target = $region32
      $region31: #{tpu_custom_call.1} parent=5 // pred_region
        %s190 = ssub.s32 %s18, 1
        %s191 = sand.u32 %s31, 1
        %s192 = scalar_lea.sflag [#allocation3], %s191
        %s193 = sand.u32 %s31, 1
        %s194 = smul.addr %s193, 16
        %s195 = scalar_lea.vmem [#allocation2], %s194
        // Predicated region
        $region33: #{tpu_custom_call.1} parent=31 // pred_check
          %p196 = pneg %p44
        $region34: #{tpu_custom_call.1} parent=31 // pred_check_branch
          %198 = sbr.rel (%p196) target = $region36
        $region35: #{tpu_custom_call.1} parent=31 // pred_region
          %199 = dma.done %s192, 256
        $region36: #{tpu_custom_call.1} parent=31 // pred_fallthru
          _
        %s200 = sand.u32 %s57, 1
        %s201 = scalar_lea.sflag [#allocation6], %s200
        %s202 = sand.u32 %s57, 1
        %s203 = scalar_lea.vmem [#allocation5], %s202
        // Predicated region
        $region37: #{tpu_custom_call.1} parent=31 // pred_check
          %p204 = pneg %p70
        $region38: #{tpu_custom_call.1} parent=31 // pred_check_branch
          %206 = sbr.rel (%p204) target = $region40
        $region39: #{tpu_custom_call.1} parent=31 // pred_region
          %207 = dma.done %s201, 16
        $region40: #{tpu_custom_call.1} parent=31 // pred_fallthru
          _
        %s208 = sand.u32 %s31, 1
        %s209 = scalar_lea.sflag [#allocation3], %s208
        %s210 = sand.u32 %s31, 1
        %s211 = smul.addr %s210, 16
        %s212 = scalar_lea.vmem [#allocation2], %s211
        %p213 = pneg %p44
        %p214 = pneg %p41
        %s215 = sand.u32 %s57, 1
        %s216 = scalar_lea.sflag [#allocation6], %s215
        %s217 = sand.u32 %s57, 1
        %s218 = scalar_lea.vmem [#allocation5], %s217
        %p219 = pneg %p70
        %p220 = pneg %p67
        %p221 = scmp.lt.s32.totalorder %s23, 2
        %s222 = scalar_select %p221, %s23, 2
        %s223 = scalar_lea.vmem %s2, %s222
        %p224 = pneg %p96
        %p225 = pneg %p93
        %p226 = pneg %p122
        %p227 = pneg %p119
        %s228 = sand.u32 %s109, 1
        %s229 = scalar_lea.sflag [#allocation4], %s228
        %s230 = sand.u32 %s109, 1
        %s231 = smul.addr %s230, 16
        %s232 = scalar_lea.vmem [#allocation7], %s231
        %p233 = scmp.lt.s32.totalorder %s23, 2
        %s234 = scalar_select %p233, %s23, 2
        %s235 = scalar_lea.vmem %s2, %s234
        %v236 = vld [vmem:[%s195] sm:$0xff]
        %v237 = vld [vmem:[%s195 + $0x8] sm:$0xff]
        %v238 = vadd.f32 %v236, %v237
        %v239 = vrot.slane %v238, 4
        %v240 = vadd.f32 %v238, %v239
        %v241 = vrot.slane %v240, 2
        %v242 = vadd.f32 %v240, %v241
        %v243 = vrot.slane %v242, 1
        %v244 = vadd.f32 %v242, %v243
        %v245 = vmul.f32 %v244, 0.0625
        %v246 = vsub.f32 %v236, %v245
        %v247 = vsub.f32 %v237, %v245
        %v248 = vmul.f32 %v246, %v246
        %v249 = vmul.f32 %v247, %v247
        %v250 = vadd.f32 %v248, %v249
        %v251 = vrot.slane %v250, 4
        %v252 = vadd.f32 %v250, %v251
        %v253 = vrot.slane %v252, 2
        %v254 = vadd.f32 %v252, %v253
        %v255 = vrot.slane %v254, 1
        %v256 = vadd.f32 %v254, %v255
        %v257 = vmul.f32 %v256, 0.0625
        %v258 = vadd.f32 %v257, 1e-05
        %v259 = vrsqrt.pop %v258
        %v260 = vld [vmem:[%s203] sm:$0x1]
        %v261 = vmul.f32 %v260, %v259
        %v262 = vld [vmem:[%s235] sm:$0x1]
        %v263 = vmul.f32 %v245, %v261
        %v264 = vsub.f32 %v262, %v263
        %v266 = vlaneseq
        %v267 = vshrl.u32 %v266, 7
        %v268 = vsub.s32 0, %v267
        %v269 = vrot.slane %v261, %v268
        %v271 = vmul.f32 %v236, %v269
        %v272 = vmul.f32 %v237, %v269
        %v274 = vlaneseq
        %v275 = vshrl.u32 %v274, 7
        %v276 = vsub.s32 0, %v275
        %v277 = vrot.slane %v264, %v276
        %v279 = vadd.f32 %v271, %v277
        %v280 = vadd.f32 %v272, %v277
        %281 = vst [vmem:[%s232] sm:$0xff] %v279
        %282 = vst [vmem:[%s232 + $0x8] sm:$0xff] %v280
        %s283 = sand.u32 %s109, 1
        %s284 = scalar_lea.sflag [#allocation4], %s283
        %s285 = sand.u32 %s109, 1
        %s286 = smul.addr %s285, 16
        %s287 = scalar_lea.vmem [#allocation7], %s286
        // Predicated region
        $region41: #{tpu_custom_call.1} parent=31 // pred_check
          %p288 = pneg %p119
        $region42: #{tpu_custom_call.1} parent=31 // pred_check_branch
          %290 = sbr.rel (%p288) target = $region44
        $region43: #{tpu_custom_call.1} parent=31 // pred_region
          %s292 = ssub.s32 256, 256
          %293 = vsyncadd %s284, %s292
          %s294 = smul.addr %s23, 128
          %s295 = scalar_lea.hbm %s3, %s294
          %s296 = sshll.u32 %s287, 4
          %s297 = int_to_ptr.vmem [resolvable:$true] %s296
          %302 = dma.vmem_to_hbm [thread:$0]  %s297, 256, %s295, %s284, 128, 384, 8
        $region44: #{tpu_custom_call.1} parent=31 // pred_fallthru
          _
      $region32: #{tpu_custom_call.1} parent=5 // pred_fallthru
        _
      %p303 = scmp.le.s32.totalorder 2, %s18
      // Predicated region
      $region45: #{tpu_custom_call.1} parent=5 // pred_check
        %p304 = pneg %p303
      $region46: #{tpu_custom_call.1} parent=5 // pred_check_branch
        %306 = sbr.rel (%p304) target = $region48
      $region47: #{tpu_custom_call.1} parent=5 // pred_region
        %s307 = ssub.s32 %s18, 2
        // Predicated region
        $region49: #{tpu_custom_call.1} parent=47 // pred_check
          %p308 = pneg %p125
        $region50: #{tpu_custom_call.1} parent=47 // pred_check_branch
          %310 = sbr.rel (%p308) target = $region52
        $region51: #{tpu_custom_call.1} parent=47 // pred_region
          %s311 = sand.u32 %s110, 1
          %s312 = scalar_lea.sflag [#allocation4], %s311
          %s313 = sand.u32 %s110, 1
          %s314 = smul.addr %s313, 16
          %s315 = scalar_lea.vmem [#allocation7], %s314
          %316 = dma.done %s312, 256
        $region52: #{tpu_custom_call.1} parent=47 // pred_fallthru
          _
      $region48: #{tpu_custom_call.1} parent=5 // pred_fallthru
        _
    $region6: #{tpu_custom_call.1} parent=1 // loop_footer
      %s22 = sadd.s32 1, %s18
    $region7: #{tpu_custom_call.1} parent=1 // loop_footer_branch
      %17 = sbr.rel target = $region3
    $region8: #{tpu_custom_call.1} parent=1 // loop_exit
      _
    %317 = vsyncpa [#allocation3], 1
    %s318 = scalar_lea.sflag [#allocation3], 1
    %319 = vsyncpa %s318, 1
    %320 = vsyncpa [#allocation6], 1
    %s321 = scalar_lea.sflag [#allocation6], 1
    %322 = vsyncpa %s321, 1
    %323 = vsyncpa [#allocation4], 1
    %s324 = scalar_lea.sflag [#allocation4], 1
    %325 = vsyncpa %s324, 1

</llo_original>
